<compile_context>
chip_gen: v7x
topology: tpu7x:2x2x1
jax: 0.10.0
libtpu: 0.0.40
codegen_flags: <defaults>
</compile_context>

<pallas_src>
import jax
import jax.numpy as jnp
from jax.experimental import pallas as pl
from jax.experimental.pallas import tpu as pltpu

HIDDEN = 100            # nn.Linear(input_size, 100)
HIDDEN_PAD = 128        # zero-padded hidden width for dense (8,128) tiling
_SPLIT_THRESHOLD = 2048  # below this, splitting the batch is pure launch overhead


def _round_up(n, m):
    return ((n + m - 1) // m) * m


def _choose_tile(B, tile_b):
    """Rows of the batch processed per grid step."""
    if B <= tile_b:
        if B > _SPLIT_THRESHOLD:
            # Keep >= 2 grid steps so the "parallel" batch axis can shard across
            # both v7x TensorCores (no-op on single-TC v5e/v6e).
            half = _round_up((B + 1) // 2, 128)
            return min(half, tile_b)
        return B  # tiny batch: one step, block == full array dims (legal)
    # Lane-dense transposed output block needs tile_b % 128 == 0 when tile_b < B.
    t = max(128, (tile_b // 128) * 128)
    return t if t < B else B


def mlp_kernel(x_ref, w1_ref, b1_ref, wht_ref, bht_ref, out_ref):
    # fc1 + ReLU: (tile_b, in) @ (in, 128) -> (tile_b, 128), dense 128-lane tiles
    # (hidden padding is exact: zero weights + zero bias, relu(0)=0).
    x = x_ref[...]
    h = jnp.dot(x, w1_ref[...], preferred_element_type=jnp.float32) + b1_ref[...]
    h = jnp.maximum(h, 0.0)
    h = h.astype(wht_ref.dtype)          # no-op in f32; enables the bf16 path

    # Fused policy+value head, computed transposed so the OUTPUT is lane-dense:
    #   (head_pad, 128) contract (tile_b, 128) over dim 1  ->  (head_pad, tile_b)
    # This is the q @ k^T contraction pattern (rhs-transposed), MXU-native.
    fused_t = jax.lax.dot_general(
        wht_ref[...], h,
        dimension_numbers=(((1,), (1,)), ((), ())),
        preferred_element_type=jnp.float32,
    ) + bht_ref[...]
    out_ref[...] = fused_t.astype(out_ref.dtype)   # dense (8, tile_b) store


def mlp_forward(x, kparams, output_size, *, tile_b=8192):
    """x: (B, input_size). kparams from prepare_kernel_params.
    Returns (action (B, output_size), value (B, 1)), both f32."""
    B, in_size = x.shape
    w1, b1 = kparams["w1"], kparams["b1"]
    wht, bht = kparams["w_head_t"], kparams["b_head_t"]
    hidden = w1.shape[1]        # 128
    head_pad = wht.shape[0]     # round_up(output_size + 1, 8)

    x = x.astype(w1.dtype)      # bf16 activations iff weights were prepared bf16

    tb = _choose_tile(B, tile_b)
    grid = (pl.cdiv(B, tb),)

    flops = 2 * B * (in_size * hidden + hidden * head_pad)
    bytes_accessed = (
        x.dtype.itemsize * x.size + 4 * B * head_pad
        + w1.dtype.itemsize * w1.size + 4 * b1.size
        + wht.dtype.itemsize * wht.size + 4 * bht.size)

    fused_t = pl.pallas_call(
        mlp_kernel,
        out_shape=jax.ShapeDtypeStruct((head_pad, B), jnp.float32),
        grid_spec=pltpu.PrefetchScalarGridSpec(
            num_scalar_prefetch=0,
            grid=grid,
            in_specs=[
                # batch-tiled activations (double-buffered by Pallas)
                pl.BlockSpec((tb, in_size), lambda i: (i, 0)),
                # weights/biases: constant index_map -> VMEM-resident, no re-DMA
                pl.BlockSpec((in_size, hidden), lambda i: (0, 0)),
                pl.BlockSpec((1, hidden), lambda i: (0, 0)),
                pl.BlockSpec((head_pad, hidden), lambda i: (0, 0)),
                pl.BlockSpec((head_pad, 1), lambda i: (0, 0)),
            ],
            # transposed output: batch on the 128-lane axis -> dense stores/DMA
            out_specs=pl.BlockSpec((head_pad, tb), lambda i: (0, i)),
        ),
        compiler_params=pltpu.CompilerParams(
            dimension_semantics=("parallel",),      # megacore sharding on v7x
            vmem_limit_bytes=48 * 1024 * 1024,      # headroom for large tiles, < 64 MiB v7x VMEM
        ),
        cost_estimate=pl.CostEstimate(
            flops=flops, transcendentals=0, bytes_accessed=bytes_accessed),
    )(x, w1, b1, wht, bht)

    # Contiguous row slices of the (head_pad, B) result; tiny transposes back to
    # the module's (B, out) / (B, 1) layout.
    action = fused_t[:output_size, :].T
    value = fused_t[output_size:output_size + 1, :].T
    return action, value


def init_params(key, input_size, output_size, hidden=HIDDEN):
    """Deterministic init mimicking nn.Linear's U(-1/sqrt(fan_in), 1/sqrt(fan_in)).
    Weights stored as (in_features, out_features) = PyTorch W.T."""
    def linear_init(k, fan_in, fan_out):
        kw, kb = jax.random.split(k)
        bound = 1.0 / jnp.sqrt(fan_in)
        w = jax.random.uniform(kw, (fan_in, fan_out), jnp.float32, -bound, bound)
        b = jax.random.uniform(kb, (1, fan_out), jnp.float32, -bound, bound)
        return w, b

    k1, k2, k3 = jax.random.split(key, 3)
    w1, b1 = linear_init(k1, input_size, hidden)
    wp, bp = linear_init(k2, hidden, output_size)
    wv, bv = linear_init(k3, hidden, 1)
    return {"w1": w1, "b1": b1, "wp": wp, "bp": bp, "wv": wv, "bv": bv}


def prepare_kernel_params(params, hidden_pad=HIDDEN_PAD, use_bf16=False):
    """Zero-pad hidden 100->128, fuse + transpose the policy/value heads, and
    pad the fused head rows to a multiple of 8 sublanes. All padding is exact:
    zero weights, zero bias, relu(0)=0 -> padded rows/cols contribute exactly 0.
    use_bf16 casts only the matmul operands (accumulation stays f32)."""
    w1, b1 = params["w1"], params["b1"]
    wp, bp = params["wp"], params["bp"]
    wv, bv = params["wv"], params["bv"]
    hidden = w1.shape[1]
    out_size = wp.shape[1]
    hpad = hidden_pad - hidden
    head = out_size + 1
    head_pad = _round_up(head, 8)

    w1p = jnp.pad(w1, ((0, 0), (0, hpad)))                                 # (in, 128)
    b1p = jnp.pad(b1, ((0, 0), (0, hpad)))                                 # (1, 128)
    w_head_t = jnp.pad(jnp.concatenate([wp, wv], axis=1).T,
                       ((0, head_pad - head), (0, hpad)))                  # (head_pad, 128)
    b_head_t = jnp.pad(jnp.concatenate([bp, bv], axis=1).T,
                       ((0, head_pad - head), (0, 0)))                     # (head_pad, 1)

    mm_dtype = jnp.bfloat16 if use_bf16 else jnp.float32
    return {
        "w1": w1p.astype(mm_dtype),
        "b1": b1p,                      # biases stay f32 (added to f32 accumulators)
        "w_head_t": w_head_t.astype(mm_dtype),
        "b_head_t": b_head_t,
    }


if __name__ == "__main__":
    key = jax.random.PRNGKey(0)
    k_x, k_x2, k_p = jax.random.split(key, 3)

    input_size, output_size = 32, 4
    params = init_params(k_p, input_size, output_size)
    kparams = prepare_kernel_params(params)

    def reference(xx):
        h = jnp.maximum(xx @ params["w1"] + params["b1"], 0.0)
        return h @ params["wp"] + params["bp"], h @ params["wv"] + params["bv"]

    # 1) Tiny batch, single grid step (block == full array dims).
    batch = 8
    x = jax.random.normal(k_x, (batch, input_size), dtype=jnp.float32)
    fwd = jax.jit(lambda xx: mlp_forward(xx, kparams, output_size))
    action, value = fwd(x)
    jax.block_until_ready((action, value))
    a_ref, v_ref = reference(x)
    assert action.shape == (batch, output_size) and value.shape == (batch, 1)
    assert jnp.allclose(action, a_ref, atol=1e-5, rtol=1e-5)
    assert jnp.allclose(value, v_ref, atol=1e-5, rtol=1e-5)

    # 2) Multi-step grid with a partial last tile (exercises pipelining + edge blocks).
    x2 = jax.random.normal(k_x2, (520, input_size), dtype=jnp.float32)
    fwd2 = jax.jit(lambda xx: mlp_forward(xx, kparams, output_size, tile_b=256))
    a2, v2 = fwd2(x2)
    jax.block_until_ready((a2, v2))
    a2_ref, v2_ref = reference(x2)
    assert a2.shape == (520, output_size) and v2.shape == (520, 1)
    assert jnp.allclose(a2, a2_ref, atol=1e-5, rtol=1e-5)
    assert jnp.allclose(v2, v2_ref, atol=1e-5, rtol=1e-5)

    print("KERNEL_OK")
</pallas_src>

<mosaic_0001>
module attributes {stable_mosaic.version = 11 : i64} {
  func.func @mlp_kernel(%arg0: i32, %arg1: memref<8x32xf32, #tpu.memory_space<vmem>>, %arg2: memref<32x128xf32, #tpu.memory_space<vmem>>, %arg3: memref<1x128xf32, #tpu.memory_space<vmem>>, %arg4: memref<8x128xf32, #tpu.memory_space<vmem>>, %arg5: memref<8x1xf32, #tpu.memory_space<vmem>>, %arg6: memref<8x8xf32, #tpu.memory_space<vmem>>) attributes {dimension_semantics = [#tpu.dimension_semantics<parallel>], iteration_bounds = array<i64: 1>, scalar_prefetch = 0 : i64, scratch_operands = 0 : i64, tpu.core_type = #tpu.core_type<tc>, window_params = [{transform_indices = @transform_0, window_bounds = array<i64: 8, 32>}, {pipeline_mode = #tpu.pipeline_mode<synchronous>, transform_indices = @transform_1, window_bounds = array<i64: 32, 128>}, {pipeline_mode = #tpu.pipeline_mode<synchronous>, transform_indices = @transform_2, window_bounds = array<i64: 1, 128>}, {pipeline_mode = #tpu.pipeline_mode<synchronous>, transform_indices = @transform_3, window_bounds = array<i64: 8, 128>}, {pipeline_mode = #tpu.pipeline_mode<synchronous>, transform_indices = @transform_4, window_bounds = array<i64: 8, 1>}, {transform_indices = @transform_5, window_bounds = array<i64: 8, 8>}]} {
    %c0 = arith.constant 0 : index
    %c0_0 = arith.constant 0 : index
    %0 = vector.load %arg1[%c0, %c0_0] : memref<8x32xf32, #tpu.memory_space<vmem>>, vector<8x32xf32>
    %c0_1 = arith.constant 0 : index
    %c0_2 = arith.constant 0 : index
    %1 = vector.load %arg2[%c0_1, %c0_2] : memref<32x128xf32, #tpu.memory_space<vmem>>, vector<32x128xf32>
    %cst = arith.constant dense<0.000000e+00> : vector<8x128xf32>
    %2 = tpu.matmul %0, %1, %cst {dimension_numbers = #tpu.dot_dimension_numbers<[1], [0], [0], [1], [0, 0, 1, 1], [], []>} : vector<8x32xf32>, vector<32x128xf32>, vector<8x128xf32> -> vector<8x128xf32>
    %c0_3 = arith.constant 0 : index
    %c0_4 = arith.constant 0 : index
    %3 = vector.load %arg3[%c0_3, %c0_4] : memref<1x128xf32, #tpu.memory_space<vmem>>, vector<1x128xf32>
    %4 = vector.broadcast %3 : vector<1x128xf32> to vector<8x128xf32>
    %5 = arith.addf %2, %4 : vector<8x128xf32>
    %cst_5 = arith.constant 0.000000e+00 : f32
    %6 = vector.broadcast %cst_5 : f32 to vector<8x128xf32>
    %7 = arith.maximumf %5, %6 : vector<8x128xf32>
    %c0_6 = arith.constant 0 : index
    %c0_7 = arith.constant 0 : index
    %8 = vector.load %arg4[%c0_6, %c0_7] : memref<8x128xf32, #tpu.memory_space<vmem>>, vector<8x128xf32>
    %cst_8 = arith.constant dense<0.000000e+00> : vector<8x8xf32>
    %9 = tpu.matmul %8, %7, %cst_8 {dimension_numbers = #tpu.dot_dimension_numbers<[1], [1], [0], [0], [0, 0, 1, 0], [], []>} : vector<8x128xf32>, vector<8x128xf32>, vector<8x8xf32> -> vector<8x8xf32>
    %c0_9 = arith.constant 0 : index
    %c0_10 = arith.constant 0 : index
    %10 = vector.load %arg5[%c0_9, %c0_10] : memref<8x1xf32, #tpu.memory_space<vmem>>, vector<8x1xf32>
    %11 = vector.broadcast %10 : vector<8x1xf32> to vector<8x8xf32>
    %12 = arith.addf %9, %11 : vector<8x8xf32>
    %c0_11 = arith.constant 0 : index
    %c0_12 = arith.constant 0 : index
    %13 = vector.load %arg6[%c0_11, %c0_12] : memref<8x8xf32, #tpu.memory_space<vmem>>, vector<8x8xf32>
    tpu.vector_store %arg6[%c0_11, %c0_12], %12 {strides = array<i32>} : memref<8x8xf32, #tpu.memory_space<vmem>>, vector<8x8xf32>,
    return
  }
  func.func @transform_0(%arg0: i32) -> (i32, i32) {
    %c0_i32 = arith.constant 0 : i32
    %c0_i32_0 = arith.constant 0 : i32
    return %arg0, %c0_i32 : i32, i32
  }
  func.func @transform_1(%arg0: i32) -> (i32, i32) {
    %c0_i32 = arith.constant 0 : i32
    %c0_i32_0 = arith.constant 0 : i32
    %c0_i32_1 = arith.constant 0 : i32
    return %c0_i32, %c0_i32_0 : i32, i32
  }
  func.func @transform_2(%arg0: i32) -> (i32, i32) {
    %c0_i32 = arith.constant 0 : i32
    %c0_i32_0 = arith.constant 0 : i32
    %c0_i32_1 = arith.constant 0 : i32
    return %c0_i32, %c0_i32_0 : i32, i32
  }
  func.func @transform_3(%arg0: i32) -> (i32, i32) {
    %c0_i32 = arith.constant 0 : i32
    %c0_i32_0 = arith.constant 0 : i32
    %c0_i32_1 = arith.constant 0 : i32
    return %c0_i32, %c0_i32_0 : i32, i32
  }
  func.func @transform_4(%arg0: i32) -> (i32, i32) {
    %c0_i32 = arith.constant 0 : i32
    %c0_i32_0 = arith.constant 0 : i32
    %c0_i32_1 = arith.constant 0 : i32
    return %c0_i32, %c0_i32_0 : i32, i32
  }
  func.func @transform_5(%arg0: i32) -> (i32, i32) {
    %c0_i32 = arith.constant 0 : i32
    %c0_i32_0 = arith.constant 0 : i32
    return %c0_i32, %arg0 : i32, i32
  }
}

</mosaic_0001>

<llo_original>
// kernel: _lambda_.1
$region0: #{_lambda_.1}
  #allocation0 [shape = 'u32[]', space=smem, size = 0x4, offset = 0x4, fixed_abs, tag = 'smem constant byte address 0x4 - core index']
  #allocation1 [shape = 'u32[144,128]{1,0:T(1,128)}', space=vmem, size = 0x12000, scoped, tag = 'internal scratch']
  %s0 = inlined_call_operand.hbm [shape: f32[8,32], index: 0, kind: input, shape index: {}]
  %s1 = inlined_call_operand.hbm [shape: f32[32,128], index: 1, kind: input, shape index: {}]
  %s2 = inlined_call_operand.vmem [shape: f32[1,128], index: 2, kind: input, shape index: {}]
  %s3 = inlined_call_operand.hbm [shape: f32[8,128], index: 3, kind: input, shape index: {}]
  %s4 = inlined_call_operand.vmem [shape: f32[8,1], index: 4, kind: input, shape index: {}]
  %s5 = inlined_call_operand.vmem [shape: f32[8,8], index: 5, kind: output, shape index: {}]
  %s6 = sld [smem:[#allocation0]]
  $region42: #{_lambda_.1} parent=0
    _
  %s8 = ssub.s32 1, %s6
  %s9 = scalar_select 0, %s8, %s6
  $region1: #{_lambda_.1} parent=0
    #allocation2 [shape = 'u8[4096]{0}', space=vmem, size = 0x1000, scoped, tag = 'input window, operand 0, single buffered']
    #allocation3 [shape = 's32[1]{0}', space=sflag, size = 0x4, scoped, tag = 'scoped memory for _lambda_.1']
    #allocation4 [shape = 'u8[16384]{0}', space=vmem, size = 0x4000, scoped, tag = 'input window, operand 1, single buffered']
    #allocation5 [shape = 's32[1]{0}', space=sflag, size = 0x4, scoped, tag = 'scoped memory for _lambda_.1']
    #allocation6 [shape = 'u8[4096]{0}', space=vmem, size = 0x1000, scoped, tag = 'input window, operand 3, single buffered']
    %10 = vsyncpa [#allocation3], 0
    %11 = vsyncpa [#allocation5], 0
    // Predicated region
    $region2: #{_lambda_.1} parent=1 // pred_check
      _
    $region3: #{_lambda_.1} parent=1 // pred_check_branch
      %13 = sbr.rel (0) target = $region5
    $region4: #{_lambda_.1} parent=1 // pred_region
      %s15 = ssub.s32 128, 128
      %16 = vsyncadd [#allocation3], %s15
      %s18 = sshll.u32 [#allocation2], 4
      %s19 = int_to_ptr.vmem [resolvable:$true] %s18
      %21 = dma.hbm_to_vmem [thread:$0]  %s0, 128, %s19, [#allocation3]
    $region5: #{_lambda_.1} parent=1 // pred_fallthru
      _
    // Predicated region
    $region6: #{_lambda_.1} parent=1 // pred_check
      _
    $region7: #{_lambda_.1} parent=1 // pred_check_branch
      %23 = sbr.rel (0) target = $region9
    $region8: #{_lambda_.1} parent=1 // pred_region
      %s25 = ssub.s32 512, 512
      %26 = vsyncadd [#allocation5], %s25
      %s27 = sshll.u32 [#allocation4], 4
      %s28 = int_to_ptr.vmem [resolvable:$true] %s27
      %33 = dma.hbm_to_vmem [thread:$0]  %s1, 512, %s28, [#allocation5], 128, 128, 8
    $region9: #{_lambda_.1} parent=1 // pred_fallthru
      _
    // Predicated region
    $region10: #{_lambda_.1} parent=1 // pred_check
      _
    $region11: #{_lambda_.1} parent=1 // pred_check_branch
      %35 = sbr.rel (0) target = $region13
    $region12: #{_lambda_.1} parent=1 // pred_region
      _
    $region13: #{_lambda_.1} parent=1 // pred_fallthru
      _
    // Predicated region
    $region14: #{_lambda_.1} parent=1 // pred_check
      _
    $region15: #{_lambda_.1} parent=1 // pred_check_branch
      %37 = sbr.rel (0) target = $region17
    $region16: #{_lambda_.1} parent=1 // pred_region
      %s39 = ssub.s32 128, 128
      %40 = vsyncadd [#allocation5], %s39
      %s42 = sshll.u32 [#allocation6], 4
      %s43 = int_to_ptr.vmem [resolvable:$true] %s42
      %45 = dma.hbm_to_vmem [thread:$0]  %s3, 128, %s43, [#allocation5]
    $region17: #{_lambda_.1} parent=1 // pred_fallthru
      _
    // Predicated region
    $region18: #{_lambda_.1} parent=1 // pred_check
      _
    $region19: #{_lambda_.1} parent=1 // pred_check_branch
      %47 = sbr.rel (0) target = $region21
    $region20: #{_lambda_.1} parent=1 // pred_region
      _
    $region21: #{_lambda_.1} parent=1 // pred_fallthru
      _
    // Predicated region
    $region22: #{_lambda_.1} parent=1 // pred_check
      _
    $region23: #{_lambda_.1} parent=1 // pred_check_branch
      %49 = sbr.rel (0) target = $region25
    $region24: #{_lambda_.1} parent=1 // pred_region
      %50 = dma.done [#allocation3], 128
    $region25: #{_lambda_.1} parent=1 // pred_fallthru
      _
    // Predicated region
    $region26: #{_lambda_.1} parent=1 // pred_check
      _
    $region27: #{_lambda_.1} parent=1 // pred_check_branch
      %52 = sbr.rel (0) target = $region29
    $region28: #{_lambda_.1} parent=1 // pred_region
      %53 = dma.done [#allocation5], 512
    $region29: #{_lambda_.1} parent=1 // pred_fallthru
      _
    // Predicated region
    $region30: #{_lambda_.1} parent=1 // pred_check
      _
    $region31: #{_lambda_.1} parent=1 // pred_check_branch
      %55 = sbr.rel (0) target = $region33
    $region32: #{_lambda_.1} parent=1 // pred_region
      %56 = dma.done [#allocation5], 128
    $region33: #{_lambda_.1} parent=1 // pred_fallthru
      _
    %v57 = vld [vmem:[#allocation2] sm:$0xff]
    %v58 = vld [vmem:[#allocation4] sm:$0xff]
    %v59 = vld [vmem:[#allocation4 + $0x8] sm:$0xff]
    %v60 = vld [vmem:[#allocation4 + $0x10] sm:$0xff]
    %v61 = vld [vmem:[#allocation4 + $0x18] sm:$0xff]
    %v62 = vld [vmem:[%s2] sm:$0x1]
    %v64 = vlaneseq
    %v65 = vshrl.u32 %v64, 7
    %v66 = vsub.s32 0, %v65
    %v67 = vrot.slane %v62, %v66
    %vm69 = vcmask 261120
    %v71 = vsel %vm69, %v57, 0
    %73 = vmatprep.subr.mxu0 0.0
    %74 = vmatpush1.msra.mxu0 %v58
    %75 = vmatprep.subr.mxu0 0.0
    %76 = vmatpush1.msra.mxu0 %v59
    %77 = vmatprep.subr.mxu0 0.0
    %78 = vmatpush1.msra.mxu0 %v60
    %79 = vmatprep.subr.mxu0 0.0
    %80 = vmatpush1.msra.mxu0 %v61
    %81 = vmatprep.subr.mxu0 0.0
    %82 = vmatpush1.msra.mxu0 0.0
    %83 = vmatprep.subr.mxu0 0.0
    %84 = vmatpush1.msra.mxu0 0.0
    %85 = vmatprep.subr.mxu0 0.0
    %86 = vmatpush1.msra.mxu0 0.0
    %87 = vmatprep.subr.mxu0 0.0
    %88 = vmatpush1.msra.mxu0 0.0
    %89 = vmatprep.subr.mxu0 0.0
    %90 = vmatpush1.msra.mxu0 0.0
    %91 = vmatprep.subr.mxu0 0.0
    %92 = vmatpush1.msra.mxu0 0.0
    %93 = vmatprep.subr.mxu0 0.0
    %94 = vmatpush1.msra.mxu0 0.0
    %95 = vmatprep.subr.mxu0 0.0
    %96 = vmatpush1.msra.mxu0 0.0
    %97 = vmatprep.subr.mxu0 0.0
    %98 = vmatpush1.msra.mxu0 0.0
    %99 = vmatprep.subr.mxu0 0.0
    %100 = vmatpush1.msra.mxu0 0.0
    %101 = vmatprep.subr.mxu0 0.0
    %102 = vmatpush1.msra.mxu0 0.0
    %103 = vmatprep.subr.mxu0 0.0
    %104 = vmatpush1.msra.mxu0 0.0
    %105 = vmatprep.subr.mxu0 0.0
    %106 = vmatpush1.msra.mxu0 0.0
    %107 = vmatprep.subr.mxu0 0.0
    %108 = vmatpush1.msra.mxu0 0.0
    %109 = vmatprep.subr.mxu0 0.0
    %110 = vmatpush1.msra.mxu0 0.0
    %111 = vmatprep.subr.mxu0 0.0
    %112 = vmatpush1.msra.mxu0 0.0
    %113 = vmatprep.subr.mxu0 0.0
    %114 = vmatpush1.msra.mxu0 0.0
    %115 = vmatprep.subr.mxu0 0.0
    %116 = vmatpush1.msra.mxu0 0.0
    %117 = vmatprep.subr.mxu0 0.0
    %118 = vmatpush1.msra.mxu0 0.0
    %119 = vmatprep.subr.mxu0 0.0
    %120 = vmatpush1.msra.mxu0 0.0
    %121 = vmatprep.subr.mxu0 0.0
    %122 = vmatpush1.msra.mxu0 0.0
    %123 = vmatprep.subr.mxu0 0.0
    %124 = vmatpush1.msra.mxu0 0.0
    %125 = vmatprep.subr.mxu0 0.0
    %126 = vmatpush1.msra.mxu0 0.0
    %127 = vmatprep.subr.mxu0 0.0
    %128 = vmatpush1.msra.mxu0 0.0
    %129 = vmatprep.subr.mxu0 0.0
    %130 = vmatpush1.msra.mxu0 0.0
    %131 = vmatprep.subr.mxu0 0.0
    %132 = vmatpush1.msra.mxu0 0.0
    %133 = vmatprep.subr.mxu0 0.0
    %134 = vmatpush1.msra.mxu0 0.0
    %135 = vmatprep.subr.mxu0 0.0
    %136 = vmatpush1.msra.mxu0 0.0
    %137 = vmatprep.mubr.f32.mxu0 0.0
    %138 = vmatmul.mubr.f32.gmra.mrb[0].mxu0 %v71
    %v139 = vpop.f32.mrb[0].mxu0
    %v140 = vadd.f32 %v67, %v139
    %v141 = vpop.f32.mrb[0].mxu0
    %142 = vdwg.mxu0
    %v143 = vmax.f32 %v140, 0.0
    %v144 = vld [vmem:[#allocation6] sm:$0xff]
    %v145 = vld [vmem:[%s4] sm:$0xff]
    %147 = vset.pattern.permute.xlu0 0
    %148 = vperm.xlu0 %147, %v145
    %v149 = vpop.permute.xlu0 %148
    %151 = vmatprep.subr.mxu0 0.0
    %152 = vmatpush1.xpose.msra.mxu0 %v143
    %153 = vmatprep.subr.mxu0 0.0
    %154 = vmatpush1.xpose.msra.mxu0 0.0
    %155 = vmatprep.subr.mxu0 0.0
    %156 = vmatpush1.xpose.msra.mxu0 0.0
    %157 = vmatprep.subr.mxu0 0.0
    %158 = vmatpush1.xpose.msra.mxu0 0.0
    %159 = vmatprep.subr.mxu0 0.0
    %160 = vmatpush1.xpose.msra.mxu0 0.0
    %161 = vmatprep.subr.mxu0 0.0
    %162 = vmatpush1.xpose.msra.mxu0 0.0
    %163 = vmatprep.subr.mxu0 0.0
    %164 = vmatpush1.xpose.msra.mxu0 0.0
    %165 = vmatprep.subr.mxu0 0.0
    %166 = vmatpush1.xpose.msra.mxu0 0.0
    %167 = vmatprep.subr.mxu0 0.0
    %168 = vmatpush1.xpose.msra.mxu0 0.0
    %169 = vmatprep.subr.mxu0 0.0
    %170 = vmatpush1.xpose.msra.mxu0 0.0
    %171 = vmatprep.subr.mxu0 0.0
    %172 = vmatpush1.xpose.msra.mxu0 0.0
    %173 = vmatprep.subr.mxu0 0.0
    %174 = vmatpush1.xpose.msra.mxu0 0.0
    %175 = vmatprep.subr.mxu0 0.0
    %176 = vmatpush1.xpose.msra.mxu0 0.0
    %177 = vmatprep.subr.mxu0 0.0
    %178 = vmatpush1.xpose.msra.mxu0 0.0
    %179 = vmatprep.subr.mxu0 0.0
    %180 = vmatpush1.xpose.msra.mxu0 0.0
    %181 = vmatprep.subr.mxu0 0.0
    %182 = vmatpush1.xpose.msra.mxu0 0.0
    %183 = vmatprep.subr.mxu0 0.0
    %184 = vmatpush1.xpose.msra.mxu0 0.0
    %185 = vmatprep.subr.mxu0 0.0
    %186 = vmatpush1.xpose.msra.mxu0 0.0
    %187 = vmatprep.subr.mxu0 0.0
    %188 = vmatpush1.xpose.msra.mxu0 0.0
    %189 = vmatprep.subr.mxu0 0.0
    %190 = vmatpush1.xpose.msra.mxu0 0.0
    %191 = vmatprep.subr.mxu0 0.0
    %192 = vmatpush1.xpose.msra.mxu0 0.0
    %193 = vmatprep.subr.mxu0 0.0
    %194 = vmatpush1.xpose.msra.mxu0 0.0
    %195 = vmatprep.subr.mxu0 0.0
    %196 = vmatpush1.xpose.msra.mxu0 0.0
    %197 = vmatprep.subr.mxu0 0.0
    %198 = vmatpush1.xpose.msra.mxu0 0.0
    %199 = vmatprep.subr.mxu0 0.0
    %200 = vmatpush1.xpose.msra.mxu0 0.0
    %201 = vmatprep.subr.mxu0 0.0
    %202 = vmatpush1.xpose.msra.mxu0 0.0
    %203 = vmatprep.subr.mxu0 0.0
    %204 = vmatpush1.xpose.msra.mxu0 0.0
    %205 = vmatprep.subr.mxu0 0.0
    %206 = vmatpush1.xpose.msra.mxu0 0.0
    %207 = vmatprep.subr.mxu0 0.0
    %208 = vmatpush1.xpose.msra.mxu0 0.0
    %209 = vmatprep.subr.mxu0 0.0
    %210 = vmatpush1.xpose.msra.mxu0 0.0
    %211 = vmatprep.subr.mxu0 0.0
    %212 = vmatpush1.xpose.msra.mxu0 0.0
    %213 = vmatprep.subr.mxu0 0.0
    %214 = vmatpush1.xpose.msra.mxu0 0.0
    %215 = vmatprep.mubr.f32.mxu0 0.0
    %216 = vmatmul.mubr.f32.gmra.mrb[0].mxu0 %v144
    %v217 = vpop.f32.mrb[0].mxu0
    %v218 = vadd.f32 %v149, %v217
    %v219 = vpop.f32.mrb[0].mxu0
    %220 = vdwg.mxu0
    %vm221 = vcmask 64512
    %222 = vst.msk [vmem:[%s5] sm:$0xff] %vm221, %v218
    // Predicated region
    $region34: #{_lambda_.1} parent=1 // pred_check
      _
    $region35: #{_lambda_.1} parent=1 // pred_check_branch
      %224 = sbr.rel (0) target = $region37
    $region36: #{_lambda_.1} parent=1 // pred_region
      _
    $region37: #{_lambda_.1} parent=1 // pred_fallthru
      _
    // Predicated region
    $region38: #{_lambda_.1} parent=1 // pred_check
      _
    $region39: #{_lambda_.1} parent=1 // pred_check_branch
      %226 = sbr.rel (0) target = $region41
    $region40: #{_lambda_.1} parent=1 // pred_region
      _
    $region41: #{_lambda_.1} parent=1 // pred_fallthru
      _
    %227 = vsyncpa [#allocation3], 1
    %228 = vsyncpa [#allocation5], 1

</llo_original>
